<compile_context>
chip_gen: v5e
topology: v5e:2x2
jax: 0.10.0
libtpu: 0.0.40
codegen_flags: <defaults>
</compile_context>

<pallas_src>
import functools

import jax
import jax.numpy as jnp
import numpy as np
from jax.experimental import pallas as pl
from jax.experimental.pallas import tpu as pltpu

_VMEM_LIMIT = 64 * 1024 * 1024


def _layernorm(x, w, b, eps=1e-5):
    mu = jnp.mean(x, axis=-1, keepdims=True)
    var = jnp.mean((x - mu) ** 2, axis=-1, keepdims=True)
    return (x - mu) * jax.lax.rsqrt(var + eps) * w + b


def _gelu_exact(x):
    # PyTorch nn.GELU default (approximate='none') -> erf-based gelu, in f32.
    return 0.5 * x * (1.0 + jax.lax.erf(x * np.float32(1.0 / np.sqrt(2.0))))


# ---------------------------------------------------------------------------
# Kernel 1: LN1 + Q/K/V projections, tiled over (batch, sequence tile).
# ---------------------------------------------------------------------------
def qkv_proj_kernel(x_ref,
                    ln1_w_ref, ln1_b_ref,
                    w_q_ref, b_q_ref,
                    w_k_ref, b_k_ref,
                    w_v_ref, b_v_ref,
                    q_ref, k_ref, v_ref,
                    *, scale):
    x = x_ref[0]                                        # (TQ, D) f32
    xn = _layernorm(x, ln1_w_ref[0], ln1_b_ref[0])      # f32 elementwise
    xn_b = xn.astype(jnp.bfloat16)                      # bf16 into the MXU

    q = jnp.dot(xn_b, w_q_ref[...], preferred_element_type=jnp.float32) + b_q_ref[0]
    k = jnp.dot(xn_b, w_k_ref[...], preferred_element_type=jnp.float32) + b_k_ref[0]
    v = jnp.dot(xn_b, w_v_ref[...], preferred_element_type=jnp.float32) + b_v_ref[0]

    q_ref[0] = (q * scale).astype(q_ref.dtype)          # fold 1/sqrt(hd) into Q
    k_ref[0] = k.astype(k_ref.dtype)
    v_ref[0] = v.astype(v_ref.dtype)


# ---------------------------------------------------------------------------
# Kernel 2: head-batched attention + out-proj + residual + LN2 + MLP + residual,
# tiled over (batch, query tile).
# ---------------------------------------------------------------------------
def attn_mlp_kernel(xq_ref, q_ref, k_ref, v_ref,
                    w_o_ref, b_o_ref,
                    ln2_w_ref, ln2_b_ref,
                    w1_ref, b1_ref,
                    w2_ref, b2_ref,
                    o_ref, *, num_heads):
    xq = xq_ref[0]                                      # (TQ, D) f32, residual
    TQ, D = xq.shape
    S = k_ref.shape[1]
    hd = D // num_heads

    q = q_ref[0]                                        # (TQ, D) bf16, pre-scaled
    k = k_ref[0]                                        # (S, D)  bf16
    v = v_ref[0]                                        # (S, D)  bf16

    # Head-batched attention: (H, TQ, hd) x (H, S, hd) -> (H, TQ, S).
    qh = q.reshape(TQ, num_heads, hd).transpose(1, 0, 2)
    kh = k.reshape(S, num_heads, hd).transpose(1, 0, 2)
    vh = v.reshape(S, num_heads, hd).transpose(1, 0, 2)

    s = jnp.einsum("hqd,hkd->hqk", qh, kh, preferred_element_type=jnp.float32)
    s = s - jnp.max(s, axis=-1, keepdims=True)          # f32 softmax
    p = jnp.exp(s)
    p = p * pl.reciprocal(jnp.sum(p, axis=-1, keepdims=True), approx=True)
    ah = jnp.einsum("hqk,hkd->hqd", p.astype(jnp.bfloat16), vh,
                    preferred_element_type=jnp.float32)
    attn = ah.transpose(1, 0, 2).reshape(TQ, D)         # back to (TQ, D)

    attn = jnp.dot(attn.astype(jnp.bfloat16), w_o_ref[...],
                   preferred_element_type=jnp.float32) + b_o_ref[0]
    x2 = attn + xq

    xn2 = _layernorm(x2, ln2_w_ref[0], ln2_b_ref[0])
    y = jnp.dot(xn2.astype(jnp.bfloat16), w1_ref[...],
                preferred_element_type=jnp.float32) + b1_ref[0]
    y = _gelu_exact(y)
    y = jnp.dot(y.astype(jnp.bfloat16), w2_ref[...],
                preferred_element_type=jnp.float32) + b2_ref[0]

    o_ref[0] = (y + x2).astype(o_ref.dtype)


def transformer_block(x, params, num_heads):
    B, S, D = x.shape
    assert D % num_heads == 0
    hd = D // num_heads
    bf = jnp.bfloat16

    # Query-tile size: full sequence for small S, else 128-row tiles.
    tq = S if S < 128 else 128
    assert S % tq == 0
    n_q = S // tq

    row = lambda v: v.reshape(1, -1)                    # 1-D params as (1, N)

    def full_spec(shape):
        n = len(shape)
        return pl.BlockSpec(shape, lambda b, qi, _n=n: (0,) * _n)

    # Split the packed QKV projection in the wrapper so no lane slicing happens
    # in-kernel; weights are pre-cast to bf16 (MXU operands), biases stay f32.
    w_qkv, b_qkv = params["w_qkv"], params["b_qkv"]
    w_q = w_qkv[:, :D].astype(bf)
    w_k = w_qkv[:, D:2 * D].astype(bf)
    w_v = w_qkv[:, 2 * D:].astype(bf)
    b_q, b_k, b_v = row(b_qkv[:D]), row(b_qkv[D:2 * D]), row(b_qkv[2 * D:])

    compiler_params = pltpu.CompilerParams(
        dimension_semantics=("parallel", "parallel"),   # batch x query-tile
        vmem_limit_bytes=_VMEM_LIMIT)

    seq_block = lambda b, qi: (b, qi, 0)
    full_seq_block = lambda b, qi: (b, 0, 0)

    # ---- kernel 1: LN1 + QKV projection ----
    k1_args = (x, row(params["ln1_w"]), row(params["ln1_b"]),
               w_q, b_q, w_k, b_k, w_v, b_v)
    k1_in_specs = [pl.BlockSpec((1, tq, D), seq_block)] + \
                  [full_spec(a.shape) for a in k1_args[1:]]
    qkv_shape = jax.ShapeDtypeStruct((B, S, D), bf)
    q_arr, k_arr, v_arr = pl.pallas_call(
        functools.partial(qkv_proj_kernel, scale=float(1.0 / np.sqrt(hd))),
        grid=(B, n_q),
        in_specs=k1_in_specs,
        out_specs=(pl.BlockSpec((1, tq, D), seq_block),) * 3,
        out_shape=(qkv_shape,) * 3,
        compiler_params=compiler_params,
    )(*k1_args)

    # ---- kernel 2: attention + out-proj + LN2 + MLP ----
    # TODO(synk): for very large hidden / sequence sizes, add an "arbitrary" grid
    # axis over the MLP hidden dim (VMEM accumulator) and over KV tiles (online
    # softmax), and single-buffer the constant-index weight blocks.
    k2_args = (x, q_arr, k_arr, v_arr,
               params["w_o"].astype(bf), row(params["b_o"]),
               row(params["ln2_w"]), row(params["ln2_b"]),
               params["w1"].astype(bf), row(params["b1"]),
               params["w2"].astype(bf), row(params["b2"]))
    k2_in_specs = [
        pl.BlockSpec((1, tq, D), seq_block),        # x query tile (residual)
        pl.BlockSpec((1, tq, D), seq_block),        # Q tile (pre-scaled, bf16)
        pl.BlockSpec((1, S, D), full_seq_block),    # K, full sequence of batch b
        pl.BlockSpec((1, S, D), full_seq_block),    # V, full sequence of batch b
    ] + [full_spec(a.shape) for a in k2_args[4:]]
    return pl.pallas_call(
        functools.partial(attn_mlp_kernel, num_heads=num_heads),
        grid=(B, n_q),
        in_specs=k2_in_specs,
        out_specs=pl.BlockSpec((1, tq, D), seq_block),
        out_shape=jax.ShapeDtypeStruct((B, S, D), x.dtype),
        compiler_params=compiler_params,
    )(*k2_args)


def reference(x, p, num_heads):
    def ln(t, w, b):
        mu = t.mean(-1, keepdims=True)
        var = ((t - mu) ** 2).mean(-1, keepdims=True)
        return (t - mu) / jnp.sqrt(var + 1e-5) * w + b

    B, S, D = x.shape
    hd = D // num_heads
    h = x
    xn = ln(x, p["ln1_w"], p["ln1_b"])
    qkv = xn @ p["w_qkv"] + p["b_qkv"]
    q, k, v = jnp.split(qkv, 3, axis=-1)
    sh = lambda t: t.reshape(B, S, num_heads, hd).transpose(0, 2, 1, 3)
    qh, kh, vh = sh(q), sh(k), sh(v)
    s = jnp.einsum("bhqd,bhkd->bhqk", qh, kh) / np.sqrt(hd)
    a = jax.nn.softmax(s, axis=-1)
    o = jnp.einsum("bhqk,bhkd->bhqd", a, vh).transpose(0, 2, 1, 3).reshape(B, S, D)
    o = o @ p["w_o"] + p["b_o"]
    x2 = o + h
    xn2 = ln(x2, p["ln2_w"], p["ln2_b"])
    y = xn2 @ p["w1"] + p["b1"]
    y = jax.nn.gelu(y, approximate=False)
    y = y @ p["w2"] + p["b2"]
    return y + x2


def make_params(key, dim, heads, mlp_ratio):
    hidden = int(dim * mlp_ratio)
    ks = jax.random.split(key, 8)
    s = 0.1
    return {
        "ln1_w": jnp.ones((dim,), jnp.float32),
        "ln1_b": jnp.zeros((dim,), jnp.float32),
        # attention in/out projections, stored already transposed: x @ W
        "w_qkv": s * jax.random.normal(ks[0], (dim, 3 * dim), jnp.float32),
        "b_qkv": s * jax.random.normal(ks[1], (3 * dim,), jnp.float32),
        "w_o": s * jax.random.normal(ks[2], (dim, dim), jnp.float32),
        "b_o": s * jax.random.normal(ks[3], (dim,), jnp.float32),
        "ln2_w": jnp.ones((dim,), jnp.float32),
        "ln2_b": jnp.zeros((dim,), jnp.float32),
        "w1": s * jax.random.normal(ks[4], (dim, hidden), jnp.float32),
        "b1": s * jax.random.normal(ks[5], (hidden,), jnp.float32),
        "w2": s * jax.random.normal(ks[6], (hidden, dim), jnp.float32),
        "b2": s * jax.random.normal(ks[7], (dim,), jnp.float32),
    }


if __name__ == "__main__":
    B, S, D, heads, mlp_ratio = 2, 8, 32, 4, 2.0
    key = jax.random.PRNGKey(0)
    kx, kp = jax.random.split(key)
    x = jax.random.normal(kx, (B, S, D), jnp.float32)
    params = make_params(kp, D, heads, mlp_ratio)

    out = transformer_block(x, params, heads)
    out = jax.block_until_ready(out)

    ref = jax.block_until_ready(reference(x, params, heads))
    assert out.shape == (B, S, D)
    # bf16 MXU operands + approximate reciprocal -> slightly looser tolerance.
    np.testing.assert_allclose(np.asarray(out), np.asarray(ref), rtol=2e-2, atol=2e-2)
    print("KERNEL_OK")
</pallas_src>

<mosaic_0001>
module attributes {stable_mosaic.version = 11 : i64} {
  func.func @qkv_proj_kernel(%arg0: i32, %arg1: i32, %arg2: memref<1x8x32xf32, #tpu.memory_space<vmem>>, %arg3: memref<1x32xf32, #tpu.memory_space<vmem>>, %arg4: memref<1x32xf32, #tpu.memory_space<vmem>>, %arg5: memref<32x32xbf16, #tpu.memory_space<vmem>>, %arg6: memref<1x32xf32, #tpu.memory_space<vmem>>, %arg7: memref<32x32xbf16, #tpu.memory_space<vmem>>, %arg8: memref<1x32xf32, #tpu.memory_space<vmem>>, %arg9: memref<32x32xbf16, #tpu.memory_space<vmem>>, %arg10: memref<1x32xf32, #tpu.memory_space<vmem>>, %arg11: memref<1x8x32xbf16, #tpu.memory_space<vmem>>, %arg12: memref<1x8x32xbf16, #tpu.memory_space<vmem>>, %arg13: memref<1x8x32xbf16, #tpu.memory_space<vmem>>) attributes {dimension_semantics = [#tpu.dimension_semantics<parallel>, #tpu.dimension_semantics<parallel>], iteration_bounds = array<i64: 2, 1>, scalar_prefetch = 0 : i64, scratch_operands = 0 : i64, tpu.core_type = #tpu.core_type<tc>, window_params = [{transform_indices = @transform_0, window_bounds = array<i64: 1, 8, 32>}, {pipeline_mode = #tpu.pipeline_mode<synchronous>, transform_indices = @transform_1, window_bounds = array<i64: 1, 32>}, {pipeline_mode = #tpu.pipeline_mode<synchronous>, transform_indices = @transform_2, window_bounds = array<i64: 1, 32>}, {pipeline_mode = #tpu.pipeline_mode<synchronous>, transform_indices = @transform_3, window_bounds = array<i64: 32, 32>}, {pipeline_mode = #tpu.pipeline_mode<synchronous>, transform_indices = @transform_4, window_bounds = array<i64: 1, 32>}, {pipeline_mode = #tpu.pipeline_mode<synchronous>, transform_indices = @transform_5, window_bounds = array<i64: 32, 32>}, {pipeline_mode = #tpu.pipeline_mode<synchronous>, transform_indices = @transform_6, window_bounds = array<i64: 1, 32>}, {pipeline_mode = #tpu.pipeline_mode<synchronous>, transform_indices = @transform_7, window_bounds = array<i64: 32, 32>}, {pipeline_mode = #tpu.pipeline_mode<synchronous>, transform_indices = @transform_8, window_bounds = array<i64: 1, 32>}, {transform_indices = @transform_9, window_bounds = array<i64: 1, 8, 32>}, {transform_indices = @transform_10, window_bounds = array<i64: 1, 8, 32>}, {transform_indices = @transform_11, window_bounds = array<i64: 1, 8, 32>}]} {
    %c0 = arith.constant 0 : index
    %c0_0 = arith.constant 0 : index
    %c0_1 = arith.constant 0 : index
    %0 = vector.load %arg2[%c0, %c0_0, %c0_1] : memref<1x8x32xf32, #tpu.memory_space<vmem>>, vector<1x8x32xf32>
    %1 = vector.shape_cast %0 : vector<1x8x32xf32> to vector<8x32xf32>
    %c0_2 = arith.constant 0 : index
    %c0_3 = arith.constant 0 : index
    %2 = vector.load %arg3[%c0_2, %c0_3] : memref<1x32xf32, #tpu.memory_space<vmem>>, vector<1x32xf32>
    %3 = vector.shape_cast %2 : vector<1x32xf32> to vector<32xf32>
    %c0_4 = arith.constant 0 : index
    %c0_5 = arith.constant 0 : index
    %4 = vector.load %arg4[%c0_4, %c0_5] : memref<1x32xf32, #tpu.memory_space<vmem>>, vector<1x32xf32>
    %5 = vector.shape_cast %4 : vector<1x32xf32> to vector<32xf32>
    %cst = arith.constant dense<0.000000e+00> : vector<8xf32>
    %6 = vector.multi_reduction <add>, %1, %cst [1] : vector<8x32xf32> to vector<8xf32>
    %7 = vector.shape_cast %6 : vector<8xf32> to vector<8x1xf32>
    %cst_6 = arith.constant 3.200000e+01 : f32
    %8 = vector.broadcast %cst_6 : f32 to vector<8x1xf32>
    %9 = arith.divf %7, %8 : vector<8x1xf32>
    %10 = vector.broadcast %9 : vector<8x1xf32> to vector<8x32xf32>
    %11 = arith.subf %1, %10 : vector<8x32xf32>
    %12 = arith.mulf %11, %11 : vector<8x32xf32>
    %cst_7 = arith.constant dense<0.000000e+00> : vector<8xf32>
    %13 = vector.multi_reduction <add>, %12, %cst_7 [1] : vector<8x32xf32> to vector<8xf32>
    %14 = vector.shape_cast %13 : vector<8xf32> to vector<8x1xf32>
    %cst_8 = arith.constant 3.200000e+01 : f32
    %15 = vector.broadcast %cst_8 : f32 to vector<8x1xf32>
    %16 = arith.divf %14, %15 : vector<8x1xf32>
    %17 = vector.broadcast %9 : vector<8x1xf32> to vector<8x32xf32>
    %18 = arith.subf %1, %17 : vector<8x32xf32>
    %cst_9 = arith.constant 9.99999974E-6 : f32
    %19 = vector.broadcast %cst_9 : f32 to vector<8x1xf32>
    %20 = arith.addf %16, %19 : vector<8x1xf32>
    %21 = math.rsqrt %20 : vector<8x1xf32>
    %22 = vector.broadcast %21 : vector<8x1xf32> to vector<8x32xf32>
    %23 = arith.mulf %18, %22 : vector<8x32xf32>
    %24 = vector.shape_cast %3 : vector<32xf32> to vector<1x32xf32>
    %25 = vector.broadcast %24 : vector<1x32xf32> to vector<8x32xf32>
    %26 = arith.mulf %23, %25 : vector<8x32xf32>
    %27 = vector.shape_cast %5 : vector<32xf32> to vector<1x32xf32>
    %28 = vector.broadcast %27 : vector<1x32xf32> to vector<8x32xf32>
    %29 = arith.addf %26, %28 : vector<8x32xf32>
    %30 = arith.truncf %29 : vector<8x32xf32> to vector<8x32xbf16>
    %c0_10 = arith.constant 0 : index
    %c0_11 = arith.constant 0 : index
    %31 = vector.load %arg5[%c0_10, %c0_11] : memref<32x32xbf16, #tpu.memory_space<vmem>>, vector<32x32xbf16>
    %cst_12 = arith.constant dense<0.000000e+00> : vector<8x32xf32>
    %32 = tpu.matmul %30, %31, %cst_12 {dimension_numbers = #tpu.dot_dimension_numbers<[1], [0], [0], [1], [0, 0, 1, 1], [], []>} : vector<8x32xbf16>, vector<32x32xbf16>, vector<8x32xf32> -> vector<8x32xf32>
    %c0_13 = arith.constant 0 : index
    %c0_14 = arith.constant 0 : index
    %33 = vector.load %arg6[%c0_13, %c0_14] : memref<1x32xf32, #tpu.memory_space<vmem>>, vector<1x32xf32>
    %34 = vector.shape_cast %33 : vector<1x32xf32> to vector<32xf32>
    %35 = vector.shape_cast %34 : vector<32xf32> to vector<1x32xf32>
    %36 = vector.broadcast %35 : vector<1x32xf32> to vector<8x32xf32>
    %37 = arith.addf %32, %36 : vector<8x32xf32>
    %c0_15 = arith.constant 0 : index
    %c0_16 = arith.constant 0 : index
    %38 = vector.load %arg7[%c0_15, %c0_16] : memref<32x32xbf16, #tpu.memory_space<vmem>>, vector<32x32xbf16>
    %cst_17 = arith.constant dense<0.000000e+00> : vector<8x32xf32>
    %39 = tpu.matmul %30, %38, %cst_17 {dimension_numbers = #tpu.dot_dimension_numbers<[1], [0], [0], [1], [0, 0, 1, 1], [], []>} : vector<8x32xbf16>, vector<32x32xbf16>, vector<8x32xf32> -> vector<8x32xf32>
    %c0_18 = arith.constant 0 : index
    %c0_19 = arith.constant 0 : index
    %40 = vector.load %arg8[%c0_18, %c0_19] : memref<1x32xf32, #tpu.memory_space<vmem>>, vector<1x32xf32>
    %41 = vector.shape_cast %40 : vector<1x32xf32> to vector<32xf32>
    %42 = vector.shape_cast %41 : vector<32xf32> to vector<1x32xf32>
    %43 = vector.broadcast %42 : vector<1x32xf32> to vector<8x32xf32>
    %44 = arith.addf %39, %43 : vector<8x32xf32>
    %c0_20 = arith.constant 0 : index
    %c0_21 = arith.constant 0 : index
    %45 = vector.load %arg9[%c0_20, %c0_21] : memref<32x32xbf16, #tpu.memory_space<vmem>>, vector<32x32xbf16>
    %cst_22 = arith.constant dense<0.000000e+00> : vector<8x32xf32>
    %46 = tpu.matmul %30, %45, %cst_22 {dimension_numbers = #tpu.dot_dimension_numbers<[1], [0], [0], [1], [0, 0, 1, 1], [], []>} : vector<8x32xbf16>, vector<32x32xbf16>, vector<8x32xf32> -> vector<8x32xf32>
    %c0_23 = arith.constant 0 : index
    %c0_24 = arith.constant 0 : index
    %47 = vector.load %arg10[%c0_23, %c0_24] : memref<1x32xf32, #tpu.memory_space<vmem>>, vector<1x32xf32>
    %48 = vector.shape_cast %47 : vector<1x32xf32> to vector<32xf32>
    %49 = vector.shape_cast %48 : vector<32xf32> to vector<1x32xf32>
    %50 = vector.broadcast %49 : vector<1x32xf32> to vector<8x32xf32>
    %51 = arith.addf %46, %50 : vector<8x32xf32>
    %cst_25 = arith.constant 0.353553385 : f32
    %52 = vector.broadcast %cst_25 : f32 to vector<8x32xf32>
    %53 = arith.mulf %37, %52 : vector<8x32xf32>
    %54 = arith.truncf %53 : vector<8x32xf32> to vector<8x32xbf16>
    %c0_26 = arith.constant 0 : index
    %c0_27 = arith.constant 0 : index
    %c0_28 = arith.constant 0 : index
    %55 = vector.load %arg11[%c0_26, %c0_27, %c0_28] : memref<1x8x32xbf16, #tpu.memory_space<vmem>>, vector<1x8x32xbf16>
    %56 = vector.shape_cast %55 : vector<1x8x32xbf16> to vector<8x32xbf16>
    %57 = vector.shape_cast %54 : vector<8x32xbf16> to vector<1x8x32xbf16>
    tpu.vector_store %arg11[%c0_26, %c0_27, %c0_28], %57 {strides = array<i32>} : memref<1x8x32xbf16, #tpu.memory_space<vmem>>, vector<1x8x32xbf16>,
    %58 = arith.truncf %44 : vector<8x32xf32> to vector<8x32xbf16>
    %c0_29 = arith.constant 0 : index
    %c0_30 = arith.constant 0 : index
    %c0_31 = arith.constant 0 : index
    %59 = vector.load %arg12[%c0_29, %c0_30, %c0_31] : memref<1x8x32xbf16, #tpu.memory_space<vmem>>, vector<1x8x32xbf16>
    %60 = vector.shape_cast %59 : vector<1x8x32xbf16> to vector<8x32xbf16>
    %61 = vector.shape_cast %58 : vector<8x32xbf16> to vector<1x8x32xbf16>
    tpu.vector_store %arg12[%c0_29, %c0_30, %c0_31], %61 {strides = array<i32>} : memref<1x8x32xbf16, #tpu.memory_space<vmem>>, vector<1x8x32xbf16>,
    %62 = arith.truncf %51 : vector<8x32xf32> to vector<8x32xbf16>
    %c0_32 = arith.constant 0 : index
    %c0_33 = arith.constant 0 : index
    %c0_34 = arith.constant 0 : index
    %63 = vector.load %arg13[%c0_32, %c0_33, %c0_34] : memref<1x8x32xbf16, #tpu.memory_space<vmem>>, vector<1x8x32xbf16>
    %64 = vector.shape_cast %63 : vector<1x8x32xbf16> to vector<8x32xbf16>
    %65 = vector.shape_cast %62 : vector<8x32xbf16> to vector<1x8x32xbf16>
    tpu.vector_store %arg13[%c0_32, %c0_33, %c0_34], %65 {strides = array<i32>} : memref<1x8x32xbf16, #tpu.memory_space<vmem>>, vector<1x8x32xbf16>,
    return
  }
  func.func @transform_0(%arg0: i32, %arg1: i32) -> (i32, i32, i32) {
    %c0_i32 = arith.constant 0 : i32
    %c0_i32_0 = arith.constant 0 : i32
    return %arg0, %arg1, %c0_i32 : i32, i32, i32
  }
  func.func @transform_1(%arg0: i32, %arg1: i32) -> (i32, i32) {
    %c0_i32 = arith.constant 0 : i32
    %c0_i32_0 = arith.constant 0 : i32
    %c0_i32_1 = arith.constant 0 : i32
    return %c0_i32, %c0_i32_0 : i32, i32
  }
  func.func @transform_2(%arg0: i32, %arg1: i32) -> (i32, i32) {
    %c0_i32 = arith.constant 0 : i32
    %c0_i32_0 = arith.constant 0 : i32
    %c0_i32_1 = arith.constant 0 : i32
    return %c0_i32, %c0_i32_0 : i32, i32
  }
  func.func @transform_3(%arg0: i32, %arg1: i32) -> (i32, i32) {
    %c0_i32 = arith.constant 0 : i32
    %c0_i32_0 = arith.constant 0 : i32
    %c0_i32_1 = arith.constant 0 : i32
    return %c0_i32, %c0_i32_0 : i32, i32
  }
  func.func @transform_4(%arg0: i32, %arg1: i32) -> (i32, i32) {
    %c0_i32 = arith.constant 0 : i32
    %c0_i32_0 = arith.constant 0 : i32
    %c0_i32_1 = arith.constant 0 : i32
    return %c0_i32, %c0_i32_0 : i32, i32
  }
  func.func @transform_5(%arg0: i32, %arg1: i32) -> (i32, i32) {
    %c0_i32 = arith.constant 0 : i32
    %c0_i32_0 = arith.constant 0 : i32
    %c0_i32_1 = arith.constant 0 : i32
    return %c0_i32, %c0_i32_0 : i32, i32
  }
  func.func @transform_6(%arg0: i32, %arg1: i32) -> (i32, i32) {
    %c0_i32 = arith.constant 0 : i32
    %c0_i32_0 = arith.constant 0 : i32
    %c0_i32_1 = arith.constant 0 : i32
    return %c0_i32, %c0_i32_0 : i32, i32
  }
  func.func @transform_7(%arg0: i32, %arg1: i32) -> (i32, i32) {
    %c0_i32 = arith.constant 0 : i32
    %c0_i32_0 = arith.constant 0 : i32
    %c0_i32_1 = arith.constant 0 : i32
    return %c0_i32, %c0_i32_0 : i32, i32
  }
  func.func @transform_8(%arg0: i32, %arg1: i32) -> (i32, i32) {
    %c0_i32 = arith.constant 0 : i32
    %c0_i32_0 = arith.constant 0 : i32
    %c0_i32_1 = arith.constant 0 : i32
    return %c0_i32, %c0_i32_0 : i32, i32
  }
  func.func @transform_9(%arg0: i32, %arg1: i32) -> (i32, i32, i32) {
    %c0_i32 = arith.constant 0 : i32
    %c0_i32_0 = arith.constant 0 : i32
    return %arg0, %arg1, %c0_i32 : i32, i32, i32
  }
  func.func @transform_10(%arg0: i32, %arg1: i32) -> (i32, i32, i32) {
    %c0_i32 = arith.constant 0 : i32
    %c0_i32_0 = arith.constant 0 : i32
    return %arg0, %arg1, %c0_i32 : i32, i32, i32
  }
  func.func @transform_11(%arg0: i32, %arg1: i32) -> (i32, i32, i32) {
    %c0_i32 = arith.constant 0 : i32
    %c0_i32_0 = arith.constant 0 : i32
    return %arg0, %arg1, %c0_i32 : i32, i32, i32
  }
}

</mosaic_0001>

<llo_original>
// kernel: tpu_custom_call.1
$region0: #{tpu_custom_call.1}
  #allocation0 [shape = 'u32[]', space=smem, size = 0x4, offset = 0x4, fixed_abs, tag = 'smem constant byte address 0x4 - core index']
  #allocation1 [shape = 'u32[72,128]{1,0:T(1,128)}', space=vmem, size = 0x9000, scoped, tag = 'internal scratch']
  %s0 = inlined_call_operand.hbm [shape: f32[2,8,32], index: 0, kind: input, shape index: {}]
  %s1 = inlined_call_operand.hbm [shape: f32[1,32], index: 1, kind: input, shape index: {}]
  %s2 = inlined_call_operand.vmem [shape: f32[1,32], index: 2, kind: input, shape index: {}]
  %s3 = inlined_call_operand.hbm [shape: bf16[32,32], index: 3, kind: input, shape index: {}]
  %s4 = inlined_call_operand.vmem [shape: f32[1,32], index: 4, kind: input, shape index: {}]
  %s5 = inlined_call_operand.hbm [shape: bf16[32,32], index: 5, kind: input, shape index: {}]
  %s6 = inlined_call_operand.vmem [shape: f32[1,32], index: 6, kind: input, shape index: {}]
  %s7 = inlined_call_operand.hbm [shape: bf16[32,32], index: 7, kind: input, shape index: {}]
  %s8 = inlined_call_operand.vmem [shape: f32[1,32], index: 8, kind: input, shape index: {}]
  %s9 = inlined_call_operand.hbm [shape: bf16[2,8,32], index: 9, kind: output, shape index: {0}]
  %s10 = inlined_call_operand.hbm [shape: bf16[2,8,32], index: 10, kind: output, shape index: {1}]
  %s11 = inlined_call_operand.hbm [shape: bf16[2,8,32], index: 11, kind: output, shape index: {2}]
  %12 = xla_tuple %s9, %s10, %s11
  %s13 = sld [smem:[#allocation0]]
  $region105: #{tpu_custom_call.1} parent=0
    _
  %s15 = ssub.s32 1, %s13
  %s16 = scalar_select 0, %s15, %s13
  $region1: #{tpu_custom_call.1} parent=0
    #allocation2 [shape = 'u8[8192]{0}', space=vmem, size = 0x2000, scoped, tag = 'input window, operand 0']
    #allocation3 [shape = 's32[2]{0}', space=sflag, size = 0x8, scoped, tag = 'scoped memory for tpu_custom_call.1']
    #allocation4 [shape = 's32[2]{0}', space=sflag, size = 0x8, scoped, tag = 'scoped memory for tpu_custom_call.1']
    #allocation5 [shape = 'u8[512]{0}', space=vmem, size = 0x400, scoped, tag = 'input window, operand 1, single buffered']
    #allocation6 [shape = 's32[1]{0}', space=sflag, size = 0x4, scoped, tag = 'scoped memory for tpu_custom_call.1']
    #allocation7 [shape = 'u8[8192]{0}', space=vmem, size = 0x2000, scoped, tag = 'input window, operand 3, single buffered']
    #allocation8 [shape = 'u8[8192]{0}', space=vmem, size = 0x2000, scoped, tag = 'input window, operand 5, single buffered']
    #allocation9 [shape = 's32[1]{0}', space=sflag, size = 0x4, scoped, tag = 'scoped memory for tpu_custom_call.1']
    #allocation10 [shape = 'u8[8192]{0}', space=vmem, size = 0x2000, scoped, tag = 'input window, operand 7, single buffered']
    #allocation11 [shape = 'u8[4096]{0}', space=vmem, size = 0x1000, scoped, tag = 'output window, operand 0']
    #allocation12 [shape = 'u8[4096]{0}', space=vmem, size = 0x1000, scoped, tag = 'output window, operand 1']
    #allocation13 [shape = 's32[2]{0}', space=sflag, size = 0x8, scoped, tag = 'scoped memory for tpu_custom_call.1']
    #allocation14 [shape = 'u8[4096]{0}', space=vmem, size = 0x1000, scoped, tag = 'output window, operand 2']
    %17 = vsyncpa [#allocation3], 0
    %s18 = scalar_lea.sflag [#allocation3], 1
    %19 = vsyncpa %s18, 0
    %20 = vsyncpa [#allocation6], 0
    %21 = vsyncpa [#allocation9], 0
    %22 = vsyncpa [#allocation4], 0
    %s23 = scalar_lea.sflag [#allocation4], 1
    %24 = vsyncpa %s23, 0
    %25 = vsyncpa [#allocation13], 0
    %s26 = scalar_lea.sflag [#allocation13], 1
    %27 = vsyncpa %s26, 0
    loop: start=0, step=1, limit=4
    $region2: #{tpu_custom_call.1} parent=1 // loop_pre_header
      _
    $region3: #{tpu_custom_call.1} parent=1 // loop_header
      %s29 = sphi 0, %s33
      %p30 = scmp.ge.s32.totalorder %s29, 4
      %s36 = sphi 0, %s48
      %s37 = sphi 0, %s44
      %s38 = sphi 0, %s36
      %s39 = sphi 0, %s37
      %s40 = sphi 0, %s38
      %s41 = sphi 0, %s39
      %s53 = sphi 0, %s55
      %s56 = sphi 0, %s53
      %s57 = sphi 0, %s56
      %s73 = sphi 0, %s57
      %s77 = sphi 0, %s77
      %s79 = sphi 0, %s77
      %s80 = sphi 0, %s79
      %s94 = sphi 0, %s80
      %s98 = sphi 0, %s98
      %s100 = sphi 0, %s98
      %s101 = sphi 0, %s100
      %s115 = sphi 0, %s101
      %s119 = sphi 0, %s119
      %s121 = sphi 0, %s119
      %s122 = sphi 0, %s121
      %s136 = sphi 0, %s122
      %s140 = sphi 0, %s140
      %s142 = sphi 0, %s140
      %s143 = sphi 0, %s142
      %s157 = sphi 0, %s143
      %s161 = sphi 0, %s161
      %s163 = sphi 0, %s161
      %s164 = sphi 0, %s163
      %s178 = sphi 0, %s164
      %s182 = sphi 0, %s182
      %s184 = sphi 0, %s182
      %s185 = sphi 0, %s184
      %s199 = sphi 0, %s185
      %s203 = sphi 0, %s203
      %s205 = sphi 0, %s203
      %s206 = sphi 0, %s205
      %s220 = sphi 0, %s206
      %s224 = sphi 0, %s224
      %s226 = sphi 0, %s224
      %s227 = sphi 0, %s226
      %s241 = sphi 0, %s227
      %s249 = sphi 0, %s251
      %s252 = sphi 0, %s249
      %s253 = sphi 0, %s252
      %s269 = sphi 0, %s253
      %s277 = sphi 0, %s279
      %s280 = sphi 0, %s277
      %s281 = sphi 0, %s280
      %s297 = sphi 0, %s281
      %s305 = sphi 0, %s307
      %s308 = sphi 0, %s305
      %s309 = sphi 0, %s308
      %s325 = sphi 0, %s309
    $region4: #{tpu_custom_call.1} parent=1 // loop_header_branch
      %32 = sbr.rel (%p30) target = $region8
    $region5: #{tpu_custom_call.1} parent=1 // loop_body
      %s34 = ssub.s32 %s29, 1
      %s35 = ssub.s32 %s29, 2
      %s42 = sadd.s32 1, %s37
      %p43 = scmp.ge.s32.totalorder %s42, 1
      %s44 = scalar_select %p43, 0, %s42
      %s45 = sadd.s32 1, %s36
      %s46 = scalar_select %p43, %s45, %s36
      %p47 = scmp.ge.s32.totalorder %s46, 2
      %s48 = scalar_select %p47, 0, %s46
      %s49 = ssub.s32 %s36, %s48
      %s50 = ssub.s32 %s37, %s44
      %s51 = sor.u32 %s49, %s50
      %p52 = scmp.eq.s32.totalorder %s51, 0
      %s54 = sadd.s32 %s53, 1
      %s55 = scalar_select %p52, %s53, %s54
      %p58 = pneg %p52
      %p59 = scmp.eq.s32.totalorder %s29, 1
      %p60 = por %p58, %p59
      %p61 = scmp.ne.s32.totalorder %s53, %s56
      %p62 = scmp.eq.s32.totalorder %s29, 0
      %p63 = por %p61, %p62
      %p64 = scmp.ne.s32.totalorder %s53, %s56
      %p65 = scmp.eq.s32.totalorder %s34, 1
      %p66 = por %p64, %p65
      %p67 = scmp.ne.s32.totalorder %s56, %s57
      %p68 = scmp.eq.s32.totalorder %s34, 0
      %p69 = por %p67, %p68
      %p70 = scmp.ne.s32.totalorder %s56, %s57
      %p71 = scmp.eq.s32.totalorder %s35, 1
      %p72 = por %p70, %p71
      %p74 = scmp.ne.s32.totalorder %s57, %s73
      %p75 = scmp.eq.s32.totalorder %s35, 0
      %p76 = por %p74, %p75
      %s78 = sadd.s32 %s77, 1
      %p81 = scmp.eq.s32.totalorder %s29, 1
      %p82 = scmp.ne.s32.totalorder %s77, %s79
      %p83 = scmp.eq.s32.totalorder %s29, 0
      %p84 = por %p82, %p83
      %p85 = scmp.ne.s32.totalorder %s77, %s79
      %p86 = scmp.eq.s32.totalorder %s34, 1
      %p87 = por %p85, %p86
      %p88 = scmp.ne.s32.totalorder %s79, %s80
      %p89 = scmp.eq.s32.totalorder %s34, 0
      %p90 = por %p88, %p89
      %p91 = scmp.ne.s32.totalorder %s79, %s80
      %p92 = scmp.eq.s32.totalorder %s35, 1
      %p93 = por %p91, %p92
      %p95 = scmp.ne.s32.totalorder %s80, %s94
      %p96 = scmp.eq.s32.totalorder %s35, 0
      %p97 = por %p95, %p96
      %s99 = sadd.s32 %s98, 1
      %p102 = scmp.eq.s32.totalorder %s29, 1
      %p103 = scmp.ne.s32.totalorder %s98, %s100
      %p104 = scmp.eq.s32.totalorder %s29, 0
      %p105 = por %p103, %p104
      %p106 = scmp.ne.s32.totalorder %s98, %s100
      %p107 = scmp.eq.s32.totalorder %s34, 1
      %p108 = por %p106, %p107
      %p109 = scmp.ne.s32.totalorder %s100, %s101
      %p110 = scmp.eq.s32.totalorder %s34, 0
      %p111 = por %p109, %p110
      %p112 = scmp.ne.s32.totalorder %s100, %s101
      %p113 = scmp.eq.s32.totalorder %s35, 1
      %p114 = por %p112, %p113
      %p116 = scmp.ne.s32.totalorder %s101, %s115
      %p117 = scmp.eq.s32.totalorder %s35, 0
      %p118 = por %p116, %p117
      %s120 = sadd.s32 %s119, 1
      %p123 = scmp.eq.s32.totalorder %s29, 1
      %p124 = scmp.ne.s32.totalorder %s119, %s121
      %p125 = scmp.eq.s32.totalorder %s29, 0
      %p126 = por %p124, %p125
      %p127 = scmp.ne.s32.totalorder %s119, %s121
      %p128 = scmp.eq.s32.totalorder %s34, 1
      %p129 = por %p127, %p128
      %p130 = scmp.ne.s32.totalorder %s121, %s122
      %p131 = scmp.eq.s32.totalorder %s34, 0
      %p132 = por %p130, %p131
      %p133 = scmp.ne.s32.totalorder %s121, %s122
      %p134 = scmp.eq.s32.totalorder %s35, 1
      %p135 = por %p133, %p134
      %p137 = scmp.ne.s32.totalorder %s122, %s136
      %p138 = scmp.eq.s32.totalorder %s35, 0
      %p139 = por %p137, %p138
      %s141 = sadd.s32 %s140, 1
      %p144 = scmp.eq.s32.totalorder %s29, 1
      %p145 = scmp.ne.s32.totalorder %s140, %s142
      %p146 = scmp.eq.s32.totalorder %s29, 0
      %p147 = por %p145, %p146
      %p148 = scmp.ne.s32.totalorder %s140, %s142
      %p149 = scmp.eq.s32.totalorder %s34, 1
      %p150 = por %p148, %p149
      %p151 = scmp.ne.s32.totalorder %s142, %s143
      %p152 = scmp.eq.s32.totalorder %s34, 0
      %p153 = por %p151, %p152
      %p154 = scmp.ne.s32.totalorder %s142, %s143
      %p155 = scmp.eq.s32.totalorder %s35, 1
      %p156 = por %p154, %p155
      %p158 = scmp.ne.s32.totalorder %s143, %s157
      %p159 = scmp.eq.s32.totalorder %s35, 0
      %p160 = por %p158, %p159
      %s162 = sadd.s32 %s161, 1
      %p165 = scmp.eq.s32.totalorder %s29, 1
      %p166 = scmp.ne.s32.totalorder %s161, %s163
      %p167 = scmp.eq.s32.totalorder %s29, 0
      %p168 = por %p166, %p167
      %p169 = scmp.ne.s32.totalorder %s161, %s163
      %p170 = scmp.eq.s32.totalorder %s34, 1
      %p171 = por %p169, %p170
      %p172 = scmp.ne.s32.totalorder %s163, %s164
      %p173 = scmp.eq.s32.totalorder %s34, 0
      %p174 = por %p172, %p173
      %p175 = scmp.ne.s32.totalorder %s163, %s164
      %p176 = scmp.eq.s32.totalorder %s35, 1
      %p177 = por %p175, %p176
      %p179 = scmp.ne.s32.totalorder %s164, %s178
      %p180 = scmp.eq.s32.totalorder %s35, 0
      %p181 = por %p179, %p180
      %s183 = sadd.s32 %s182, 1
      %p186 = scmp.eq.s32.totalorder %s29, 1
      %p187 = scmp.ne.s32.totalorder %s182, %s184
      %p188 = scmp.eq.s32.totalorder %s29, 0
      %p189 = por %p187, %p188
      %p190 = scmp.ne.s32.totalorder %s182, %s184
      %p191 = scmp.eq.s32.totalorder %s34, 1
      %p192 = por %p190, %p191
      %p193 = scmp.ne.s32.totalorder %s184, %s185
      %p194 = scmp.eq.s32.totalorder %s34, 0
      %p195 = por %p193, %p194
      %p196 = scmp.ne.s32.totalorder %s184, %s185
      %p197 = scmp.eq.s32.totalorder %s35, 1
      %p198 = por %p196, %p197
      %p200 = scmp.ne.s32.totalorder %s185, %s199
      %p201 = scmp.eq.s32.totalorder %s35, 0
      %p202 = por %p200, %p201
      %s204 = sadd.s32 %s203, 1
      %p207 = scmp.eq.s32.totalorder %s29, 1
      %p208 = scmp.ne.s32.totalorder %s203, %s205
      %p209 = scmp.eq.s32.totalorder %s29, 0
      %p210 = por %p208, %p209
      %p211 = scmp.ne.s32.totalorder %s203, %s205
      %p212 = scmp.eq.s32.totalorder %s34, 1
      %p213 = por %p211, %p212
      %p214 = scmp.ne.s32.totalorder %s205, %s206
      %p215 = scmp.eq.s32.totalorder %s34, 0
      %p216 = por %p214, %p215
      %p217 = scmp.ne.s32.totalorder %s205, %s206
      %p218 = scmp.eq.s32.totalorder %s35, 1
      %p219 = por %p217, %p218
      %p221 = scmp.ne.s32.totalorder %s206, %s220
      %p222 = scmp.eq.s32.totalorder %s35, 0
      %p223 = por %p221, %p222
      %s225 = sadd.s32 %s224, 1
      %p228 = scmp.eq.s32.totalorder %s29, 1
      %p229 = scmp.ne.s32.totalorder %s224, %s226
      %p230 = scmp.eq.s32.totalorder %s29, 0
      %p231 = por %p229, %p230
      %p232 = scmp.ne.s32.totalorder %s224, %s226
      %p233 = scmp.eq.s32.totalorder %s34, 1
      %p234 = por %p232, %p233
      %p235 = scmp.ne.s32.totalorder %s226, %s227
      %p236 = scmp.eq.s32.totalorder %s34, 0
      %p237 = por %p235, %p236
      %p238 = scmp.ne.s32.totalorder %s226, %s227
      %p239 = scmp.eq.s32.totalorder %s35, 1
      %p240 = por %p238, %p239
      %p242 = scmp.ne.s32.totalorder %s227, %s241
      %p243 = scmp.eq.s32.totalorder %s35, 0
      %p244 = por %p242, %p243
      %s245 = ssub.s32 %s36, %s48
      %s246 = ssub.s32 %s37, %s44
      %s247 = sor.u32 %s245, %s246
      %p248 = scmp.eq.s32.totalorder %s247, 0
      %s250 = sadd.s32 %s249, 1
      %s251 = scalar_select %p248, %s249, %s250
      %p254 = pneg %p248
      %p255 = scmp.eq.s32.totalorder %s29, 1
      %p256 = por %p254, %p255
      %p257 = scmp.ne.s32.totalorder %s249, %s252
      %p258 = scmp.eq.s32.totalorder %s29, 0
      %p259 = por %p257, %p258
      %p260 = scmp.ne.s32.totalorder %s249, %s252
      %p261 = scmp.eq.s32.totalorder %s34, 1
      %p262 = por %p260, %p261
      %p263 = scmp.ne.s32.totalorder %s252, %s253
      %p264 = scmp.eq.s32.totalorder %s34, 0
      %p265 = por %p263, %p264
      %p266 = scmp.ne.s32.totalorder %s252, %s253
      %p267 = scmp.eq.s32.totalorder %s35, 1
      %p268 = por %p266, %p267
      %p270 = scmp.ne.s32.totalorder %s253, %s269
      %p271 = scmp.eq.s32.totalorder %s35, 0
      %p272 = por %p270, %p271
      %s273 = ssub.s32 %s36, %s48
      %s274 = ssub.s32 %s37, %s44
      %s275 = sor.u32 %s273, %s274
      %p276 = scmp.eq.s32.totalorder %s275, 0
      %s278 = sadd.s32 %s277, 1
      %s279 = scalar_select %p276, %s277, %s278
      %p282 = pneg %p276
      %p283 = scmp.eq.s32.totalorder %s29, 1
      %p284 = por %p282, %p283
      %p285 = scmp.ne.s32.totalorder %s277, %s280
      %p286 = scmp.eq.s32.totalorder %s29, 0
      %p287 = por %p285, %p286
      %p288 = scmp.ne.s32.totalorder %s277, %s280
      %p289 = scmp.eq.s32.totalorder %s34, 1
      %p290 = por %p288, %p289
      %p291 = scmp.ne.s32.totalorder %s280, %s281
      %p292 = scmp.eq.s32.totalorder %s34, 0
      %p293 = por %p291, %p292
      %p294 = scmp.ne.s32.totalorder %s280, %s281
      %p295 = scmp.eq.s32.totalorder %s35, 1
      %p296 = por %p294, %p295
      %p298 = scmp.ne.s32.totalorder %s281, %s297
      %p299 = scmp.eq.s32.totalorder %s35, 0
      %p300 = por %p298, %p299
      %s301 = ssub.s32 %s36, %s48
      %s302 = ssub.s32 %s37, %s44
      %s303 = sor.u32 %s301, %s302
      %p304 = scmp.eq.s32.totalorder %s303, 0
      %s306 = sadd.s32 %s305, 1
      %s307 = scalar_select %p304, %s305, %s306
      %p310 = pneg %p304
      %p311 = scmp.eq.s32.totalorder %s29, 1
      %p312 = por %p310, %p311
      %p313 = scmp.ne.s32.totalorder %s305, %s308
      %p314 = scmp.eq.s32.totalorder %s29, 0
      %p315 = por %p313, %p314
      %p316 = scmp.ne.s32.totalorder %s305, %s308
      %p317 = scmp.eq.s32.totalorder %s34, 1
      %p318 = por %p316, %p317
      %p319 = scmp.ne.s32.totalorder %s308, %s309
      %p320 = scmp.eq.s32.totalorder %s34, 0
      %p321 = por %p319, %p320
      %p322 = scmp.ne.s32.totalorder %s308, %s309
      %p323 = scmp.eq.s32.totalorder %s35, 1
      %p324 = por %p322, %p323
      %p326 = scmp.ne.s32.totalorder %s309, %s325
      %p327 = scmp.eq.s32.totalorder %s35, 0
      %p328 = por %p326, %p327
      %p329 = scmp.le.s32.totalorder 1, %s29
      %p330 = scmp.lt.s32.totalorder %s29, 3
      %p331 = pnand %p329, %p330
      %p332 = pneg %p331
      // Predicated region
      $region9: #{tpu_custom_call.1} parent=5 // pred_check
        _
      $region10: #{tpu_custom_call.1} parent=5 // pred_check_branch
        %334 = sbr.rel (%p331) target = $region12
      $region11: #{tpu_custom_call.1} parent=5 // pred_region
        %s335 = ssub.s32 %s29, 1
        // Predicated region
        $region13: #{tpu_custom_call.1} parent=11 // pred_check
          %p336 = pneg %p90
        $region14: #{tpu_custom_call.1} parent=11 // pred_check_branch
          %338 = sbr.rel (%p336) target = $region16
        $region15: #{tpu_custom_call.1} parent=11 // pred_region
          %340 = vsyncadd [#allocation6], 0
          %s342 = sshll.u32 %s1, 4
          %s343 = int_to_ptr.hbm [resolvable:$true] %s342
          %s344 = sshll.u32 [#allocation5], 4
          %s345 = int_to_ptr.vmem [resolvable:$true] %s344
          %347 = dma.hbm_to_vmem [thread:$0]  %s343, 16, %s345, [#allocation6]
        $region16: #{tpu_custom_call.1} parent=11 // pred_fallthru
          _
        // Predicated region
        $region17: #{tpu_custom_call.1} parent=11 // pred_check
          %p348 = pneg %p111
        $region18: #{tpu_custom_call.1} parent=11 // pred_check_branch
          %350 = sbr.rel (%p348) target = $region20
        $region19: #{tpu_custom_call.1} parent=11 // pred_region
          _
        $region20: #{tpu_custom_call.1} parent=11 // pred_fallthru
          _
        // Predicated region
        $region21: #{tpu_custom_call.1} parent=11 // pred_check
          %p351 = pneg %p132
        $region22: #{tpu_custom_call.1} parent=11 // pred_check_branch
          %353 = sbr.rel (%p351) target = $region24
        $region23: #{tpu_custom_call.1} parent=11 // pred_region
          %355 = vsyncadd [#allocation6], 0
          %s356 = sshll.u32 %s3, 4
          %s357 = int_to_ptr.hbm [resolvable:$true] %s356
          %s358 = sshll.u32 [#allocation7], 4
          %s359 = int_to_ptr.vmem [resolvable:$true] %s358
          %364 = dma.hbm_to_vmem [thread:$0]  %s357, 256, %s359, [#allocation6], 64, 64, 4
        $region24: #{tpu_custom_call.1} parent=11 // pred_fallthru
          _
        // Predicated region
        $region25: #{tpu_custom_call.1} parent=11 // pred_check
          %p365 = pneg %p153
        $region26: #{tpu_custom_call.1} parent=11 // pred_check_branch
          %367 = sbr.rel (%p365) target = $region28
        $region27: #{tpu_custom_call.1} parent=11 // pred_region
          _
        $region28: #{tpu_custom_call.1} parent=11 // pred_fallthru
          _
        // Predicated region
        $region29: #{tpu_custom_call.1} parent=11 // pred_check
          %p368 = pneg %p174
        $region30: #{tpu_custom_call.1} parent=11 // pred_check_branch
          %370 = sbr.rel (%p368) target = $region32
        $region31: #{tpu_custom_call.1} parent=11 // pred_region
          %372 = vsyncadd [#allocation9], 0
          %s373 = sshll.u32 %s5, 4
          %s374 = int_to_ptr.hbm [resolvable:$true] %s373
          %s375 = sshll.u32 [#allocation8], 4
          %s376 = int_to_ptr.vmem [resolvable:$true] %s375
          %381 = dma.hbm_to_vmem [thread:$0]  %s374, 256, %s376, [#allocation9], 64, 64, 4
        $region32: #{tpu_custom_call.1} parent=11 // pred_fallthru
          _
        // Predicated region
        $region33: #{tpu_custom_call.1} parent=11 // pred_check
          %p382 = pneg %p195
        $region34: #{tpu_custom_call.1} parent=11 // pred_check_branch
          %384 = sbr.rel (%p382) target = $region36
        $region35: #{tpu_custom_call.1} parent=11 // pred_region
          _
        $region36: #{tpu_custom_call.1} parent=11 // pred_fallthru
          _
        // Predicated region
        $region37: #{tpu_custom_call.1} parent=11 // pred_check
          %p385 = pneg %p216
        $region38: #{tpu_custom_call.1} parent=11 // pred_check_branch
          %387 = sbr.rel (%p385) target = $region40
        $region39: #{tpu_custom_call.1} parent=11 // pred_region
          %389 = vsyncadd [#allocation9], 0
          %s390 = sshll.u32 %s7, 4
          %s391 = int_to_ptr.hbm [resolvable:$true] %s390
          %s392 = sshll.u32 [#allocation10], 4
          %s393 = int_to_ptr.vmem [resolvable:$true] %s392
          %398 = dma.hbm_to_vmem [thread:$0]  %s391, 256, %s393, [#allocation9], 64, 64, 4
        $region40: #{tpu_custom_call.1} parent=11 // pred_fallthru
          _
        // Predicated region
        $region41: #{tpu_custom_call.1} parent=11 // pred_check
          %p399 = pneg %p237
        $region42: #{tpu_custom_call.1} parent=11 // pred_check_branch
          %401 = sbr.rel (%p399) target = $region44
        $region43: #{tpu_custom_call.1} parent=11 // pred_region
          _
        $region44: #{tpu_custom_call.1} parent=11 // pred_fallthru
          _
      $region12: #{tpu_custom_call.1} parent=5 // pred_fallthru
        _
      %p402 = scmp.lt.s32.totalorder %s29, 2
      // Predicated region
      $region45: #{tpu_custom_call.1} parent=5 // pred_check
        %p403 = pneg %p402
      $region46: #{tpu_custom_call.1} parent=5 // pred_check_branch
        %405 = sbr.rel (%p403) target = $region48
      $region47: #{tpu_custom_call.1} parent=5 // pred_region
        // Predicated region
        $region49: #{tpu_custom_call.1} parent=47 // pred_check
          %p406 = pneg %p63
        $region50: #{tpu_custom_call.1} parent=47 // pred_check_branch
          %408 = sbr.rel (%p406) target = $region52
        $region51: #{tpu_custom_call.1} parent=47 // pred_region
          %s409 = sand.u32 %s53, 1
          %s410 = scalar_lea.sflag [#allocation3], %s409
          %s411 = sand.u32 %s53, 1
          %s412 = smul.addr %s411, 8
          %s413 = scalar_lea.vmem [#allocation2], %s412
          %415 = vsyncadd %s410, 0
          %s416 = sadd.s32 %s37, %s36
          %s417 = smul.addr %s416, 8
          %s418 = scalar_lea.hbm %s0, %s417
          %s420 = sshll.u32 %s418, 4
          %s421 = int_to_ptr.hbm [resolvable:$true] %s420
          %s422 = sshll.u32 %s413, 4
          %s423 = int_to_ptr.vmem [resolvable:$true] %s422
          %425 = dma.hbm_to_vmem [thread:$0]  %s421, 128, %s423, %s410
        $region52: #{tpu_custom_call.1} parent=47 // pred_fallthru
          _
      $region48: #{tpu_custom_call.1} parent=5 // pred_fallthru
        _
      %p426 = scmp.le.s32.totalorder 1, %s29
      %p427 = scmp.lt.s32.totalorder %s29, 3
      %p428 = pnand %p426, %p427
      %p429 = pneg %p428
      // Predicated region
      $region53: #{tpu_custom_call.1} parent=5 // pred_check
        _
      $region54: #{tpu_custom_call.1} parent=5 // pred_check_branch
        %431 = sbr.rel (%p428) target = $region56
      $region55: #{tpu_custom_call.1} parent=5 // pred_region
        %s432 = ssub.s32 %s29, 1
        %s433 = sand.u32 %s56, 1
        %s434 = scalar_lea.sflag [#allocation3], %s433
        %s435 = sand.u32 %s56, 1
        %s436 = smul.addr %s435, 8
        %s437 = scalar_lea.vmem [#allocation2], %s436
        // Predicated region
        $region57: #{tpu_custom_call.1} parent=55 // pred_check
          %p438 = pneg %p69
        $region58: #{tpu_custom_call.1} parent=55 // pred_check_branch
          %440 = sbr.rel (%p438) target = $region60
        $region59: #{tpu_custom_call.1} parent=55 // pred_region
          %442 = dma.done %s434, 128
        $region60: #{tpu_custom_call.1} parent=55 // pred_fallthru
          _
        // Predicated region
        $region61: #{tpu_custom_call.1} parent=55 // pred_check
          %p443 = pneg %p90
        $region62: #{tpu_custom_call.1} parent=55 // pred_check_branch
          %445 = sbr.rel (%p443) target = $region64
        $region63: #{tpu_custom_call.1} parent=55 // pred_region
          %447 = dma.done [#allocation6], 16
        $region64: #{tpu_custom_call.1} parent=55 // pred_fallthru
          _
        // Predicated region
        $region65: #{tpu_custom_call.1} parent=55 // pred_check
          %p448 = pneg %p132
        $region66: #{tpu_custom_call.1} parent=55 // pred_check_branch
          %450 = sbr.rel (%p448) target = $region68
        $region67: #{tpu_custom_call.1} parent=55 // pred_region
          %452 = dma.done [#allocation6], 256
        $region68: #{tpu_custom_call.1} parent=55 // pred_fallthru
          _
        // Predicated region
        $region69: #{tpu_custom_call.1} parent=55 // pred_check
          %p453 = pneg %p174
        $region70: #{tpu_custom_call.1} parent=55 // pred_check_branch
          %455 = sbr.rel (%p453) target = $region72
        $region71: #{tpu_custom_call.1} parent=55 // pred_region
          %457 = dma.done [#allocation9], 256
        $region72: #{tpu_custom_call.1} parent=55 // pred_fallthru
          _
        // Predicated region
        $region73: #{tpu_custom_call.1} parent=55 // pred_check
          %p458 = pneg %p216
        $region74: #{tpu_custom_call.1} parent=55 // pred_check_branch
          %460 = sbr.rel (%p458) target = $region76
        $region75: #{tpu_custom_call.1} parent=55 // pred_region
          %462 = dma.done [#allocation9], 256
        $region76: #{tpu_custom_call.1} parent=55 // pred_fallthru
          _
        %s463 = sand.u32 %s56, 1
        %s464 = scalar_lea.sflag [#allocation3], %s463
        %s465 = sand.u32 %s56, 1
        %s466 = smul.addr %s465, 8
        %s467 = scalar_lea.vmem [#allocation2], %s466
        %p468 = pneg %p69
        %p469 = pneg %p66
        %p470 = pneg %p90
        %p471 = pneg %p87
        %p472 = pneg %p111
        %p473 = pneg %p108
        %p474 = pneg %p132
        %p475 = pneg %p129
        %p476 = pneg %p153
        %p477 = pneg %p150
        %p478 = pneg %p174
        %p479 = pneg %p171
        %p480 = pneg %p195
        %p481 = pneg %p192
        %p482 = pneg %p216
        %p483 = pneg %p213
        %p484 = pneg %p237
        %p485 = pneg %p234
        %p486 = pneg %p265
        %p487 = pneg %p262
        %s488 = sand.u32 %s252, 1
        %s489 = scalar_lea.sflag [#allocation4], %s488
        %s490 = sand.u32 %s252, 1
        %s491 = smul.addr %s490, 4
        %s492 = scalar_lea.vmem [#allocation11], %s491
        %p493 = pneg %p293
        %p494 = pneg %p290
        %s495 = sand.u32 %s34, 1
        %s496 = scalar_lea.sflag [#allocation13], %s495
        %s497 = sand.u32 %s280, 1
        %s498 = smul.addr %s497, 4
        %s499 = scalar_lea.vmem [#allocation12], %s498
        %p500 = pneg %p321
        %p501 = pneg %p318
        %s502 = sand.u32 %s34, 1
        %s503 = scalar_lea.sflag [#allocation13], %s502
        %s504 = sand.u32 %s308, 1
        %s505 = smul.addr %s504, 4
        %s506 = scalar_lea.vmem [#allocation14], %s505
        %v508 = vld [vmem:[%s437] sm:$0xff]
        %v509 = vld [vmem:[#allocation5] sm:$0x1]
        %v510 = vld [vmem:[%s2] sm:$0x1]
        %vm511 = vcmask 261120
        %v512 = vsel %vm511, %v508, 0.0
        %513 = vadd.xlane.f32.xlu0 %v512
        %v514 = vpop.xlane.xlu0 %513
        %v515 = vrcp.pop 32.0
        %v516 = vmul.f32 32.0, %v515
        %v517 = vsub.f32 1.0, %v516
        %v518 = vmul.f32 %v515, %v517
        %v519 = vadd.f32 %v515, %v518
        %vm520 = vweird.f32 %v515
        %v521 = vsel %vm520, %v515, %v519
        %v522 = vmul.f32 %v514, %v521
        %v523 = vsub.f32 %v508, %v522
        %v524 = vmul.f32 %v523, %v523
        %v525 = vsel %vm511, %v524, 0.0
        %526 = vadd.xlane.f32.xlu0 %v525
        %v527 = vpop.xlane.xlu0 %526
        %v528 = vmul.f32 %v527, %v521
        %v529 = vadd.f32 %v528, 1e-05
        %v530 = vrsqrt.pop %v529
        %v531 = vmul.f32 %v530, %v529
        %v532 = vmul.f32 %v531, %v530
        %v533 = vmul.f32 0.5, %v532
        %v534 = vsub.f32 1.5, %v533
        %v535 = vmul.f32 %v530, %v534
        %vm536 = vweird.f32 %v529
        %vm537 = vweird.f32 %v530
        %vm538 = vmor %vm536, %vm537
        %v539 = vsel %vm538, %v530, %v535
        %v540 = vmul.f32 %v523, %v539
        %v542 = vperm.slane %v509, 0
        %v544 = vmul.f32 %v540, %v542
        %v546 = vperm.slane %v510, 0
        %v548 = vadd.f32 %v544, %v546
        %v549 = vpack.c.bf16 %v548, %v548
        %v550 = vld [vmem:[#allocation7] sm:$0xf]
        %v551 = vld [vmem:[#allocation7 + $0x4] sm:$0xf]
        %v552 = vld [vmem:[#allocation7 + $0x8] sm:$0xf]
        %v553 = vld [vmem:[#allocation7 + $0xc] sm:$0xf]
        %v554 = vld [vmem:[%s4] sm:$0x1]
        %v556 = vperm.slane %v554, 0
        %v562 = vunpack.c.l.b16 %v550
        %v563 = vunpack.c.l.b16 %v551
        %v564 = vunpack.c.l.b16 %v552
        %v565 = vunpack.c.l.b16 %v553
        %v566 = vpack.c.b16 %v563, %v562
        %v567 = vpack.c.b16 %v565, %v564
        %v571 = vsel %vm511, %v549, 0
        %573 = vmatpush.bf16.msra.mxu0 0
        %574 = vmatpush.bf16.msra.mxu0 0
        %575 = vmatpush.bf16.msra.mxu0 0
        %576 = vmatpush.bf16.msra.mxu0 0
        %577 = vmatpush.bf16.msra.mxu0 0
        %578 = vmatpush.bf16.msra.mxu0 0
        %579 = vmatpush.bf16.msra.mxu0 %v567
        %580 = vmatpush.bf16.msra.mxu0 %v566
        %581 = vmatmul.bf16.gmra.mxu0 %v571
        %v582 = vpop.f32.mrf.mxu0
        %v583 = vadd.f32 %v556, %v582
        %v584 = vpop.f32.mrf.mxu0
        %585 = vdwg.mxu0
        %v586 = vld [vmem:[#allocation8] sm:$0xf]
        %v587 = vld [vmem:[#allocation8 + $0x4] sm:$0xf]
        %v588 = vld [vmem:[#allocation8 + $0x8] sm:$0xf]
        %v589 = vld [vmem:[#allocation8 + $0xc] sm:$0xf]
        %v590 = vld [vmem:[%s6] sm:$0x1]
        %v592 = vperm.slane %v590, 0
        %v598 = vunpack.c.l.b16 %v586
        %v599 = vunpack.c.l.b16 %v587
        %v600 = vunpack.c.l.b16 %v588
        %v601 = vunpack.c.l.b16 %v589
        %v602 = vpack.c.b16 %v599, %v598
        %v603 = vpack.c.b16 %v601, %v600
        %606 = vmatpush.bf16.msra.mxu0 0
        %607 = vmatpush.bf16.msra.mxu0 0
        %608 = vmatpush.bf16.msra.mxu0 0
        %609 = vmatpush.bf16.msra.mxu0 0
        %610 = vmatpush.bf16.msra.mxu0 0
        %611 = vmatpush.bf16.msra.mxu0 0
        %612 = vmatpush.bf16.msra.mxu0 %v603
        %613 = vmatpush.bf16.msra.mxu0 %v602
        %614 = vmatmul.bf16.gmra.mxu0 %v571
        %v615 = vpop.f32.mrf.mxu0
        %v616 = vadd.f32 %v592, %v615
        %v617 = vpop.f32.mrf.mxu0
        %618 = vdwg.mxu0
        %v619 = vld [vmem:[#allocation10] sm:$0xf]
        %v620 = vld [vmem:[#allocation10 + $0x4] sm:$0xf]
        %v621 = vld [vmem:[#allocation10 + $0x8] sm:$0xf]
        %v622 = vld [vmem:[#allocation10 + $0xc] sm:$0xf]
        %v623 = vld [vmem:[%s8] sm:$0x1]
        %v625 = vperm.slane %v623, 0
        %v631 = vunpack.c.l.b16 %v619
        %v632 = vunpack.c.l.b16 %v620
        %v633 = vunpack.c.l.b16 %v621
        %v634 = vunpack.c.l.b16 %v622
        %v635 = vpack.c.b16 %v632, %v631
        %v636 = vpack.c.b16 %v634, %v633
        %639 = vmatpush.bf16.msra.mxu0 0
        %640 = vmatpush.bf16.msra.mxu0 0
        %641 = vmatpush.bf16.msra.mxu0 0
        %642 = vmatpush.bf16.msra.mxu0 0
        %643 = vmatpush.bf16.msra.mxu0 0
        %644 = vmatpush.bf16.msra.mxu0 0
        %645 = vmatpush.bf16.msra.mxu0 %v636
        %646 = vmatpush.bf16.msra.mxu0 %v635
        %647 = vmatmul.bf16.gmra.mxu0 %v571
        %v648 = vpop.f32.mrf.mxu0
        %v649 = vadd.f32 %v625, %v648
        %v650 = vpop.f32.mrf.mxu0
        %651 = vdwg.mxu0
        %v652 = vmul.f32 %v583, 0.35355338
        %v653 = vpack.c.bf16 %v652, %v652
        %vm654 = vcmask 257024
        %655 = vst.msk [vmem:[%s492] sm:$0xf] %vm654, %v653
        %v656 = vpack.c.bf16 %v616, %v616
        %657 = vst.msk [vmem:[%s499] sm:$0xf] %vm654, %v656
        %v658 = vpack.c.bf16 %v649, %v649
        %659 = vst.msk [vmem:[%s506] sm:$0xf] %vm654, %v658
        %s660 = sand.u32 %s252, 1
        %s661 = scalar_lea.sflag [#allocation4], %s660
        %s662 = sand.u32 %s252, 1
        %s663 = smul.addr %s662, 4
        %s664 = scalar_lea.vmem [#allocation11], %s663
        %s665 = sand.u32 %s34, 1
        %s666 = scalar_lea.sflag [#allocation13], %s665
        %s667 = sand.u32 %s280, 1
        %s668 = smul.addr %s667, 4
        %s669 = scalar_lea.vmem [#allocation12], %s668
        %s670 = sand.u32 %s34, 1
        %s671 = scalar_lea.sflag [#allocation13], %s670
        %s672 = sand.u32 %s308, 1
        %s673 = smul.addr %s672, 4
        %s674 = scalar_lea.vmem [#allocation14], %s673
        // Predicated region
        $region77: #{tpu_custom_call.1} parent=55 // pred_check
          %p675 = pneg %p262
        $region78: #{tpu_custom_call.1} parent=55 // pred_check_branch
          %677 = sbr.rel (%p675) target = $region80
        $region79: #{tpu_custom_call.1} parent=55 // pred_region
          %679 = vsyncadd %s661, 0
          %s680 = sadd.s32 %s39, %s38
          %s681 = smul.addr %s680, 4
          %s682 = scalar_lea.hbm %s9, %s681
          %s684 = sshll.u32 %s664, 4
          %s685 = int_to_ptr.vmem [resolvable:$true] %s684
          %s686 = sshll.u32 %s682, 4
          %s687 = int_to_ptr.hbm [resolvable:$true] %s686
          %689 = dma.vmem_to_hbm [thread:$0]  %s685, 64, %s687, %s661
        $region80: #{tpu_custom_call.1} parent=55 // pred_fallthru
          _
        // Predicated region
        $region81: #{tpu_custom_call.1} parent=55 // pred_check
          %p690 = pneg %p290
        $region82: #{tpu_custom_call.1} parent=55 // pred_check_branch
          %692 = sbr.rel (%p690) target = $region84
        $region83: #{tpu_custom_call.1} parent=55 // pred_region
          %694 = vsyncadd %s666, 0
          %s695 = sadd.s32 %s39, %s38
          %s696 = smul.addr %s695, 4
          %s697 = scalar_lea.hbm %s10, %s696
          %s699 = sshll.u32 %s669, 4
          %s700 = int_to_ptr.vmem [resolvable:$true] %s699
          %s701 = sshll.u32 %s697, 4
          %s702 = int_to_ptr.hbm [resolvable:$true] %s701
          %704 = dma.vmem_to_hbm [thread:$0]  %s700, 64, %s702, %s666
        $region84: #{tpu_custom_call.1} parent=55 // pred_fallthru
          _
        // Predicated region
        $region85: #{tpu_custom_call.1} parent=55 // pred_check
          %p705 = pneg %p318
        $region86: #{tpu_custom_call.1} parent=55 // pred_check_branch
          %707 = sbr.rel (%p705) target = $region88
        $region87: #{tpu_custom_call.1} parent=55 // pred_region
          %709 = vsyncadd %s671, 0
          %s710 = sadd.s32 %s39, %s38
          %s711 = smul.addr %s710, 4
          %s712 = scalar_lea.hbm %s11, %s711
          %s714 = sshll.u32 %s674, 4
          %s715 = int_to_ptr.vmem [resolvable:$true] %s714
          %s716 = sshll.u32 %s712, 4
          %s717 = int_to_ptr.hbm [resolvable:$true] %s716
          %719 = dma.vmem_to_hbm [thread:$0]  %s715, 64, %s717, %s671
        $region88: #{tpu_custom_call.1} parent=55 // pred_fallthru
          _
      $region56: #{tpu_custom_call.1} parent=5 // pred_fallthru
        _
      %p720 = scmp.le.s32.totalorder 2, %s29
      // Predicated region
      $region89: #{tpu_custom_call.1} parent=5 // pred_check
        %p721 = pneg %p720
      $region90: #{tpu_custom_call.1} parent=5 // pred_check_branch
        %723 = sbr.rel (%p721) target = $region92
      $region91: #{tpu_custom_call.1} parent=5 // pred_region
        %s724 = ssub.s32 %s29, 2
        // Predicated region
        $region93: #{tpu_custom_call.1} parent=91 // pred_check
          %p725 = pneg %p268
        $region94: #{tpu_custom_call.1} parent=91 // pred_check_branch
          %727 = sbr.rel (%p725) target = $region96
        $region95: #{tpu_custom_call.1} parent=91 // pred_region
          %s728 = sand.u32 %s253, 1
          %s729 = scalar_lea.sflag [#allocation4], %s728
          %s730 = sand.u32 %s253, 1
          %s731 = smul.addr %s730, 4
          %s732 = scalar_lea.vmem [#allocation11], %s731
          %734 = dma.done %s729, 64
        $region96: #{tpu_custom_call.1} parent=91 // pred_fallthru
          _
        // Predicated region
        $region97: #{tpu_custom_call.1} parent=91 // pred_check
          %p735 = pneg %p296
        $region98: #{tpu_custom_call.1} parent=91 // pred_check_branch
          %737 = sbr.rel (%p735) target = $region100
        $region99: #{tpu_custom_call.1} parent=91 // pred_region
          %s738 = sand.u32 %s35, 1
          %s739 = scalar_lea.sflag [#allocation13], %s738
          %s740 = sand.u32 %s281, 1
          %s741 = smul.addr %s740, 4
          %s742 = scalar_lea.vmem [#allocation12], %s741
          %744 = dma.done %s739, 64
        $region100: #{tpu_custom_call.1} parent=91 // pred_fallthru
          _
        // Predicated region
        $region101: #{tpu_custom_call.1} parent=91 // pred_check
          %p745 = pneg %p324
        $region102: #{tpu_custom_call.1} parent=91 // pred_check_branch
          %747 = sbr.rel (%p745) target = $region104
        $region103: #{tpu_custom_call.1} parent=91 // pred_region
          %s748 = sand.u32 %s35, 1
          %s749 = scalar_lea.sflag [#allocation13], %s748
          %s750 = sand.u32 %s309, 1
          %s751 = smul.addr %s750, 4
          %s752 = scalar_lea.vmem [#allocation14], %s751
          %754 = dma.done %s749, 64
        $region104: #{tpu_custom_call.1} parent=91 // pred_fallthru
          _
      $region92: #{tpu_custom_call.1} parent=5 // pred_fallthru
        _
    $region6: #{tpu_custom_call.1} parent=1 // loop_footer
      %s33 = sadd.s32 1, %s29
    $region7: #{tpu_custom_call.1} parent=1 // loop_footer_branch
      %28 = sbr.rel target = $region3
    $region8: #{tpu_custom_call.1} parent=1 // loop_exit
      _
    %755 = vsyncpa [#allocation3], 1
    %s756 = scalar_lea.sflag [#allocation3], 1
    %757 = vsyncpa %s756, 1
    %758 = vsyncpa [#allocation6], 1
    %759 = vsyncpa [#allocation9], 1
    %760 = vsyncpa [#allocation4], 1
    %s761 = scalar_lea.sflag [#allocation4], 1
    %762 = vsyncpa %s761, 1
    %763 = vsyncpa [#allocation13], 1
    %s764 = scalar_lea.sflag [#allocation13], 1
    %765 = vsyncpa %s764, 1

</llo_original>
